<compile_context>
chip_gen: v7x
topology: tpu7x:2x2x1
jax: 0.10.0
libtpu: 0.0.40
codegen_flags: <defaults>
</compile_context>

<pallas_src>
import jax
import jax.numpy as jnp
from jax.experimental import pallas as pl
from jax.experimental.pallas import tpu as pltpu


def _dma_copy_kernel(x_hbm_ref, o_hbm_ref, sem):
    # A view's "compute" is pure data movement: one HBM->HBM DMA.
    cp = pltpu.make_async_copy(x_hbm_ref, o_hbm_ref, sem)
    cp.start()
    cp.wait()


def _pallas_copy(x):
    """Materialize a distinct copy of `x` via a direct HBM->HBM DMA."""
    nbytes = x.size * jnp.dtype(x.dtype).itemsize
    return pl.pallas_call(
        _dma_copy_kernel,
        out_shape=jax.ShapeDtypeStruct(x.shape, x.dtype),
        in_specs=[pl.BlockSpec(memory_space=pl.ANY)],
        out_specs=pl.BlockSpec(memory_space=pl.ANY),
        scratch_shapes=[pltpu.SemaphoreType.DMA],
        cost_estimate=pl.CostEstimate(
            flops=0, transcendentals=0, bytes_accessed=2 * nbytes),
    )(x)


def _resolve_sizes(sizes, f):
    """torch .view-style size resolution (supports a single -1)."""
    sizes = tuple(int(s) for s in sizes)
    neg = sum(1 for s in sizes if s == -1)
    if neg > 1:
        raise ValueError("only one -1 allowed in sizes")
    known = 1
    for s in sizes:
        if s != -1:
            known *= s
    if neg == 1:
        if known == 0 or f % known != 0:
            raise ValueError(f"cannot infer -1: {f} not divisible by {known}")
        sizes = tuple(f // known if s == -1 else s for s in sizes)
    tgt = 1
    for s in sizes:
        tgt *= s
    if tgt != f:
        raise ValueError(f"cannot view {f} features as {sizes}")
    return sizes


def pallas_view(x, sizes, *, use_pallas_copy=False):
    """Equivalent of torch `x.view(x.size(0), *sizes)`.

    Default path is metadata-only (free).  `use_pallas_copy=True` returns a
    distinct materialized buffer produced by a Pallas HBM->HBM DMA kernel.
    """
    b = x.shape[0]
    f = 1
    for d in x.shape[1:]:
        f *= d
    sizes = _resolve_sizes(sizes, f)
    out_shape = (b,) + sizes

    reshaped = x.reshape(out_shape)  # metadata-only relabel, like torch .view
    if not use_pallas_copy:
        return reshaped
    return _pallas_copy(reshaped)


class View:
    """JAX/Pallas mirror of the PyTorch View module."""

    def __init__(self, *sizes, use_pallas_copy=False):
        self.sizes = tuple(sizes)
        self.use_pallas_copy = use_pallas_copy

    def __call__(self, x):
        return pallas_view(x, self.sizes, use_pallas_copy=self.use_pallas_copy)

    def __repr__(self):
        return self.__class__.__name__ + " (sizes=%s)" % str(self.sizes)


if __name__ == "__main__":
    key = jax.random.PRNGKey(0)
    # NCHW input: batch=2, channels=4, H=16, W=16 -> 1024 features per batch
    x = jax.random.normal(key, (2, 4, 16, 16), dtype=jnp.float32)
    y_ref = x.reshape(2, 16, 64)

    # Default (recommended) path: metadata-only view, matches torch semantics.
    view = View(16, 64)
    y = jax.block_until_ready(view(x))
    assert y.shape == (2, 16, 64), y.shape
    assert y.dtype == x.dtype
    assert bool(jnp.array_equal(y, y_ref))

    # Gated Pallas copy path: direct HBM->HBM DMA, bit-exact, distinct buffer.
    view_k = View(16, 64, use_pallas_copy=True)
    yk = jax.block_until_ready(view_k(x))
    assert yk.shape == (2, 16, 64), yk.shape
    assert yk.dtype == x.dtype
    assert bool(jnp.array_equal(yk, y_ref))

    # No input donation: works under jit and x stays usable afterwards.
    yk_jit = jax.block_until_ready(jax.jit(view_k)(x))
    assert bool(jnp.array_equal(yk_jit, y_ref))
    assert bool(jnp.array_equal(x.reshape(2, 16, 64), y_ref))

    # -1 inference (torch .view supports it), also through the kernel path.
    view_neg = View(-1, 64, use_pallas_copy=True)
    yn = jax.block_until_ready(view_neg(x))
    assert yn.shape == (2, 16, 64), yn.shape
    assert bool(jnp.array_equal(yn, y_ref))

    # Non-lane-friendly size (105 features): previously a degenerate layout,
    # now handled identically by the DMA copy.
    x_odd = jax.random.normal(key, (2, 3, 5, 7), dtype=jnp.float32)
    view_odd = View(-1, use_pallas_copy=True)
    yo = jax.block_until_ready(view_odd(x_odd))
    assert yo.shape == (2, 105), yo.shape
    assert bool(jnp.array_equal(yo, x_odd.reshape(2, 105)))

    print("KERNEL_OK")
</pallas_src>

<mosaic_0001>
module attributes {stable_mosaic.version = 11 : i64} {
  func.func @_dma_copy_kernel(%arg0: memref<2x16x64xf32, #tpu.memory_space<any>>, %arg1: memref<2x16x64xf32, #tpu.memory_space<any>>, %arg2: memref<!tpu.dma_semaphore, #tpu.memory_space<semaphore_mem>>) attributes {dimension_semantics = [], scalar_prefetch = 0 : i64, scratch_operands = 1 : i64, tpu.core_type = #tpu.core_type<tc>} {
    tpu.enqueue_dma source(%arg0 : memref<2x16x64xf32, #tpu.memory_space<any>>) target(%arg1 : memref<2x16x64xf32, #tpu.memory_space<any>>) target_semaphore(%arg2 : memref<!tpu.dma_semaphore, #tpu.memory_space<semaphore_mem>>)
    tpu.wait_dma2 semaphore(%arg2 : memref<!tpu.dma_semaphore, #tpu.memory_space<semaphore_mem>>) src(%arg0 : memref<2x16x64xf32, #tpu.memory_space<any>>) dst(%arg1 : memref<2x16x64xf32, #tpu.memory_space<any>>)
    return
  }
}

</mosaic_0001>

<llo_original>
// kernel: tpu_custom_call.1
$region0: #{tpu_custom_call.1}
  #allocation0 [shape = 'u32[]', space=smem, size = 0x4, offset = 0x4, fixed_abs, tag = 'smem constant byte address 0x4 - core index']
  #allocation1 [shape = 'u32[144,128]{1,0:T(1,128)}', space=vmem, size = 0x12000, scoped, tag = 'internal scratch']
  #allocation2 [shape = 's32[1]{0}', space=sflag, size = 0x4, scoped, tag = 'scratch operand']
  #allocation3 [shape = 's32[]', space=sflag, size = 0x4, offset = 0, fixed_abs, tag = 'sflag constant byte address 0x0 - dummy sync flag']
  #allocation4 [shape = 'u32[0]{0}', space=smem, size = 0, offset = 0, fixed_abs, tag = 'smem constant byte address 0x0 - null']
  %s0 = inlined_call_operand.hbm [shape: f32[2,16,64], index: 0, kind: input, shape index: {}]
  %s1 = inlined_call_operand.hbm [shape: f32[2,16,64], index: 1, kind: output, shape index: {}]
  %s2 = sld [smem:[#allocation0]]
  $region2: #{tpu_custom_call.1} parent=0
    _
  %s4 = ssub.s32 1, %s2
  %s5 = scalar_select 0, %s4, %s2
  %s7 = sshll.u32 1, 14
  %s8 = sxor.u32 4294967295, %s7
  %s11 = sshll.u32 3, 24
  %s12 = sxor.u32 4294967295, %s11
  %s13 = sand.u32 0, %s12
  %s15 = sor.u32 %s13, 0
  %18 = dma.general %s0, 512, %s1, [#allocation2], [#allocation3], [#allocation4], %s15, 0
  %s19 = smul.u32 2, 16
  %s20 = smul.u32 %s19, 1
  %s21 = sshll.u32 %s20, 4
  %22 = dma.done [#allocation2], %s21
  %23 = vsyncmov [#allocation2]
  %s24 = vpop.sfrf %23
  %p25 = scmp.eq.s32.totalorder %s24, 0
  %p26 = pneg %p25
  %28 = shalt.err (%p26)

</llo_original>
